<compile_context>
chip_gen: v7x
topology: tpu7x:2x2x1
jax: 0.10.0
libtpu: 0.0.40
codegen_flags: <defaults>
</compile_context>

<pallas_src>
import functools

import jax
import jax.numpy as jnp
from jax.experimental import pallas as pl
from jax.experimental.pallas import tpu as pltpu


def _product_linear_kernel(x_ref, w_ref, b_ref, o_ref, *, num_prods):
    # x_ref: (C, tn)            one batch's channels x spatial tile (lanes = spatial)
    # w_ref: (out_dim, C + P)   1x1-conv weight, columns [orig channels | products]
    # b_ref: (out_dim, 1)       bias, f32
    # o_ref: (out_dim, tn)      output tile
    x = x_ref[...]                                            # native dtype -> MXU
    prods = [x[2 * i:2 * i + 1, :] * x[2 * i + 1:2 * i + 2, :]
             for i in range(num_prods)]                       # each (1, tn)
    xc = jnp.concatenate([x] + prods, axis=0)                 # (C + P, tn)
    y = jnp.dot(w_ref[...], xc, preferred_element_type=jnp.float32)
    o_ref[...] = (y + b_ref[...]).astype(o_ref.dtype)


@functools.partial(jax.jit, static_argnames=("num_prods", "tile_n"))
def product_layer(x, weight, bias, *, num_prods, tile_n=2048):
    """ProductLayer forward.

    Args:
      x:      (B, in_dim, H, W)  (NCHW, matching the PyTorch module)
      weight: (out_dim, in_dim + num_prods)  1x1-conv weight (kernel dims squeezed)
      bias:   (out_dim,)
    Returns:
      (B, out_dim, H, W), dtype of x.
    """
    B, C, H, W = x.shape
    out_dim, in_lin = weight.shape
    assert in_lin == C + num_prods
    assert C >= 2 * num_prods
    HW = H * W

    # NCHW-native: flatten spatial only (contiguous reshape, no HBM copy).
    x3 = x.reshape(B, C, HW)

    # Lane tile: full spatial extent if small (always legal), otherwise a
    # multiple of 128; ragged last block handled by Pallas writeback masking.
    tn = HW if HW <= tile_n else (tile_n // 128) * 128
    grid = (B, pl.cdiv(HW, tn))

    # Hoisted casts: keep the big tiles in their native dtype (MXU takes bf16/f32
    # directly), weight matches x, bias stays f32 for the accumulator add.
    w_k = weight.astype(x.dtype)                       # (out_dim, C + P)
    b_k = bias.astype(jnp.float32).reshape(out_dim, 1)

    # Double-buffered VMEM footprint (input + output blocks dominate; weight/bias
    # are tiny).  Keep well under the smallest default scoped VMEM (16 MiB, v5e)
    # so no explicit vmem_limit_bytes is needed on any generation (v7x incl.).
    vmem_est = 2 * tn * (C + out_dim) * x.dtype.itemsize
    assert vmem_est < 12 * 1024 * 1024, "lane tile too large for scoped VMEM"

    out3 = pl.pallas_call(
        functools.partial(_product_linear_kernel, num_prods=num_prods),
        out_shape=jax.ShapeDtypeStruct((B, out_dim, HW), x.dtype),
        grid_spec=pltpu.PrefetchScalarGridSpec(
            num_scalar_prefetch=0,
            grid=grid,
            in_specs=[
                # (None, C, tn): batch dim squeezed out; C equals the full
                # channel dim and tn is a 128-multiple (or the full extent),
                # satisfying the (8,128) block rule for any C.
                pl.BlockSpec((None, C, tn), lambda b, j: (b, 0, j)),
                pl.BlockSpec((out_dim, C + num_prods), lambda b, j: (0, 0)),
                pl.BlockSpec((out_dim, 1), lambda b, j: (0, 0)),
            ],
            out_specs=pl.BlockSpec((None, out_dim, tn), lambda b, j: (b, 0, j)),
        ),
        compiler_params=pltpu.CompilerParams(
            dimension_semantics=("parallel", "parallel")),
    )(x3, w_k, b_k)

    return out3.reshape(B, out_dim, H, W)


def _reference(x, weight, bias, num_prods):
    # pure-JAX reference matching the PyTorch module
    prods = jnp.stack(
        [x[:, 2 * i, ...] * x[:, 2 * i + 1, ...] for i in range(num_prods)],
        axis=1)
    xc = jnp.concatenate([x, prods], axis=1)           # (B, in_lin, H, W)
    return jnp.einsum("oc,bchw->bohw", weight, xc) + bias[None, :, None, None]


if __name__ == "__main__":
    # Module config (consistent with in_dim >= 2*num_prods)
    B, in_dim, H, W = 2, 4, 16, 16
    num_prods = 2
    out_dim = 8
    in_dim_linear = in_dim + num_prods

    key = jax.random.PRNGKey(0)
    kx, kw, kb = jax.random.split(key, 3)

    x = jax.random.normal(kx, (B, in_dim, H, W), dtype=jnp.float32)
    # deterministic init of the 1x1-conv (MLP n_layers=1) parameters
    weight = jax.random.normal(kw, (out_dim, in_dim_linear), dtype=jnp.float32) * 0.1
    bias = jax.random.normal(kb, (out_dim,), dtype=jnp.float32) * 0.1

    y_ref = _reference(x, weight, bias, num_prods)

    # 1) single spatial block per batch (grid = (B, 1))
    y = product_layer(x, weight, bias, num_prods=num_prods)
    y = jax.block_until_ready(y)
    assert y.shape == (B, out_dim, H, W)
    assert jnp.allclose(y, y_ref, atol=1e-5, rtol=1e-5), "mismatch vs reference"

    # 2) multi-tile path: force a smaller lane tile so the grid is (B, 2)
    y_tiled = product_layer(x, weight, bias, num_prods=num_prods, tile_n=128)
    y_tiled = jax.block_until_ready(y_tiled)
    assert jnp.allclose(y_tiled, y_ref, atol=1e-5, rtol=1e-5), "tiled mismatch"

    print("KERNEL_OK")
</pallas_src>

<mosaic_0001>
module attributes {stable_mosaic.version = 11 : i64} {
  func.func @_product_linear_kernel(%arg0: i32, %arg1: i32, %arg2: memref<1x4x256xf32, #tpu.memory_space<vmem>>, %arg3: memref<8x6xf32, #tpu.memory_space<vmem>>, %arg4: memref<8x1xf32, #tpu.memory_space<vmem>>, %arg5: memref<1x8x256xf32, #tpu.memory_space<vmem>>) attributes {dimension_semantics = [#tpu.dimension_semantics<parallel>, #tpu.dimension_semantics<parallel>], iteration_bounds = array<i64: 2, 1>, scalar_prefetch = 0 : i64, scratch_operands = 0 : i64, tpu.core_type = #tpu.core_type<tc>, window_params = [{transform_indices = @transform_0, window_bounds = array<i64: 1, 4, 256>}, {pipeline_mode = #tpu.pipeline_mode<synchronous>, transform_indices = @transform_1, window_bounds = array<i64: 8, 6>}, {pipeline_mode = #tpu.pipeline_mode<synchronous>, transform_indices = @transform_2, window_bounds = array<i64: 8, 1>}, {transform_indices = @transform_3, window_bounds = array<i64: 1, 8, 256>}]} {
    %c0 = arith.constant 0 : index
    %c0_0 = arith.constant 0 : index
    %c0_1 = arith.constant 0 : index
    %0 = vector.load %arg2[%c0, %c0_0, %c0_1] : memref<1x4x256xf32, #tpu.memory_space<vmem>>, vector<1x4x256xf32>
    %1 = vector.shape_cast %0 : vector<1x4x256xf32> to vector<4x256xf32>
    %2 = vector.extract_strided_slice %1 {offsets = [0, 0], sizes = [1, 256], strides = [1, 1]} : vector<4x256xf32> to vector<1x256xf32>
    %3 = vector.extract_strided_slice %1 {offsets = [1, 0], sizes = [1, 256], strides = [1, 1]} : vector<4x256xf32> to vector<1x256xf32>
    %4 = arith.mulf %2, %3 : vector<1x256xf32>
    %5 = vector.extract_strided_slice %1 {offsets = [2, 0], sizes = [1, 256], strides = [1, 1]} : vector<4x256xf32> to vector<1x256xf32>
    %6 = vector.extract_strided_slice %1 {offsets = [3, 0], sizes = [1, 256], strides = [1, 1]} : vector<4x256xf32> to vector<1x256xf32>
    %7 = arith.mulf %5, %6 : vector<1x256xf32>
    %8 = tpu.concatenate %1, %4, %7 in 0 : vector<4x256xf32>, vector<1x256xf32>, vector<1x256xf32> -> vector<6x256xf32>
    %c0_2 = arith.constant 0 : index
    %c0_3 = arith.constant 0 : index
    %9 = vector.load %arg3[%c0_2, %c0_3] : memref<8x6xf32, #tpu.memory_space<vmem>>, vector<8x6xf32>
    %cst = arith.constant dense<0.000000e+00> : vector<8x256xf32>
    %10 = tpu.matmul %9, %8, %cst {dimension_numbers = #tpu.dot_dimension_numbers<[1], [0], [0], [1], [0, 0, 1, 1], [], []>} : vector<8x6xf32>, vector<6x256xf32>, vector<8x256xf32> -> vector<8x256xf32>
    %c0_4 = arith.constant 0 : index
    %c0_5 = arith.constant 0 : index
    %11 = vector.load %arg4[%c0_4, %c0_5] : memref<8x1xf32, #tpu.memory_space<vmem>>, vector<8x1xf32>
    %12 = vector.broadcast %11 : vector<8x1xf32> to vector<8x256xf32>
    %13 = arith.addf %10, %12 : vector<8x256xf32>
    %c0_6 = arith.constant 0 : index
    %c0_7 = arith.constant 0 : index
    %c0_8 = arith.constant 0 : index
    %14 = vector.load %arg5[%c0_6, %c0_7, %c0_8] : memref<1x8x256xf32, #tpu.memory_space<vmem>>, vector<1x8x256xf32>
    %15 = vector.shape_cast %14 : vector<1x8x256xf32> to vector<8x256xf32>
    %16 = vector.shape_cast %13 : vector<8x256xf32> to vector<1x8x256xf32>
    tpu.vector_store %arg5[%c0_6, %c0_7, %c0_8], %16 {strides = array<i32>} : memref<1x8x256xf32, #tpu.memory_space<vmem>>, vector<1x8x256xf32>,
    return
  }
  func.func @transform_0(%arg0: i32, %arg1: i32) -> (i32, i32, i32) {
    %c0_i32 = arith.constant 0 : i32
    %c0_i32_0 = arith.constant 0 : i32
    return %arg0, %c0_i32, %arg1 : i32, i32, i32
  }
  func.func @transform_1(%arg0: i32, %arg1: i32) -> (i32, i32) {
    %c0_i32 = arith.constant 0 : i32
    %c0_i32_0 = arith.constant 0 : i32
    %c0_i32_1 = arith.constant 0 : i32
    return %c0_i32, %c0_i32_0 : i32, i32
  }
  func.func @transform_2(%arg0: i32, %arg1: i32) -> (i32, i32) {
    %c0_i32 = arith.constant 0 : i32
    %c0_i32_0 = arith.constant 0 : i32
    %c0_i32_1 = arith.constant 0 : i32
    return %c0_i32, %c0_i32_0 : i32, i32
  }
  func.func @transform_3(%arg0: i32, %arg1: i32) -> (i32, i32, i32) {
    %c0_i32 = arith.constant 0 : i32
    %c0_i32_0 = arith.constant 0 : i32
    return %arg0, %c0_i32, %arg1 : i32, i32, i32
  }
}

</mosaic_0001>

<llo_original>
// kernel: product_layer.1
$region0: #{product_layer.1}
  #allocation0 [shape = 'u32[]', space=smem, size = 0x4, offset = 0x4, fixed_abs, tag = 'smem constant byte address 0x4 - core index']
  #allocation1 [shape = 'u32[144,128]{1,0:T(1,128)}', space=vmem, size = 0x12000, scoped, tag = 'internal scratch']
  %s0 = inlined_call_operand.vmem [shape: f32[2,4,256], index: 0, kind: input, shape index: {}]
  %s1 = inlined_call_operand.vmem [shape: f32[8,6], index: 1, kind: input, shape index: {}]
  %s2 = inlined_call_operand.vmem [shape: f32[8,1], index: 2, kind: input, shape index: {}]
  %s3 = inlined_call_operand.vmem [shape: f32[2,8,256], index: 3, kind: output, shape index: {}]
  %s4 = sld [smem:[#allocation0]]
  $region45: #{product_layer.1} parent=0
    _
  %s6 = ssub.s32 1, %s4
  %s7 = scalar_select 0, %s6, %s4
  loop: start=0, step=1, limit=4
  $region2: #{product_layer.1} parent=0 // loop_pre_header
    _
  $region3: #{product_layer.1} parent=0 // loop_header
    %s9 = sphi 0, %s13
    %p10 = scmp.ge.s32.totalorder %s9, 4
    %s16 = sphi 0, %s28
    %s17 = sphi 0, %s24
    %s18 = sphi 0, %s16
    %s19 = sphi 0, %s17
    %s20 = sphi 0, %s18
    %s21 = sphi 0, %s19
    %s33 = sphi 0, %s35
    %s36 = sphi 0, %s33
    %s37 = sphi 0, %s36
    %s53 = sphi 0, %s37
    %s57 = sphi 0, %s57
    %s59 = sphi 0, %s57
    %s60 = sphi 0, %s59
    %s74 = sphi 0, %s60
    %s78 = sphi 0, %s78
    %s80 = sphi 0, %s78
    %s81 = sphi 0, %s80
    %s95 = sphi 0, %s81
    %s103 = sphi 0, %s105
    %s106 = sphi 0, %s103
    %s107 = sphi 0, %s106
    %s123 = sphi 0, %s107
  $region4: #{product_layer.1} parent=0 // loop_header_branch
    %12 = sbr.rel (%p10) target = $region8
  $region5: #{product_layer.1} parent=0 // loop_body
    %s14 = ssub.s32 %s9, 1
    %s15 = ssub.s32 %s9, 2
    %s22 = sadd.s32 1, %s17
    %p23 = scmp.ge.s32.totalorder %s22, 1
    %s24 = scalar_select %p23, 0, %s22
    %s25 = sadd.s32 1, %s16
    %s26 = scalar_select %p23, %s25, %s16
    %p27 = scmp.ge.s32.totalorder %s26, 2
    %s28 = scalar_select %p27, 0, %s26
    %s29 = ssub.s32 %s16, %s28
    %s30 = ssub.s32 %s17, %s24
    %s31 = sor.u32 %s29, %s30
    %p32 = scmp.eq.s32.totalorder %s31, 0
    %s34 = sadd.s32 %s33, 1
    %s35 = scalar_select %p32, %s33, %s34
    %p38 = pneg %p32
    %p39 = scmp.eq.s32.totalorder %s9, 1
    %p40 = por %p38, %p39
    %p41 = scmp.ne.s32.totalorder %s33, %s36
    %p42 = scmp.eq.s32.totalorder %s9, 0
    %p43 = por %p41, %p42
    %p44 = scmp.ne.s32.totalorder %s33, %s36
    %p45 = scmp.eq.s32.totalorder %s14, 1
    %p46 = por %p44, %p45
    %p47 = scmp.ne.s32.totalorder %s36, %s37
    %p48 = scmp.eq.s32.totalorder %s14, 0
    %p49 = por %p47, %p48
    %p50 = scmp.ne.s32.totalorder %s36, %s37
    %p51 = scmp.eq.s32.totalorder %s15, 1
    %p52 = por %p50, %p51
    %p54 = scmp.ne.s32.totalorder %s37, %s53
    %p55 = scmp.eq.s32.totalorder %s15, 0
    %p56 = por %p54, %p55
    %s58 = sadd.s32 %s57, 1
    %p61 = scmp.eq.s32.totalorder %s9, 1
    %p62 = scmp.ne.s32.totalorder %s57, %s59
    %p63 = scmp.eq.s32.totalorder %s9, 0
    %p64 = por %p62, %p63
    %p65 = scmp.ne.s32.totalorder %s57, %s59
    %p66 = scmp.eq.s32.totalorder %s14, 1
    %p67 = por %p65, %p66
    %p68 = scmp.ne.s32.totalorder %s59, %s60
    %p69 = scmp.eq.s32.totalorder %s14, 0
    %p70 = por %p68, %p69
    %p71 = scmp.ne.s32.totalorder %s59, %s60
    %p72 = scmp.eq.s32.totalorder %s15, 1
    %p73 = por %p71, %p72
    %p75 = scmp.ne.s32.totalorder %s60, %s74
    %p76 = scmp.eq.s32.totalorder %s15, 0
    %p77 = por %p75, %p76
    %s79 = sadd.s32 %s78, 1
    %p82 = scmp.eq.s32.totalorder %s9, 1
    %p83 = scmp.ne.s32.totalorder %s78, %s80
    %p84 = scmp.eq.s32.totalorder %s9, 0
    %p85 = por %p83, %p84
    %p86 = scmp.ne.s32.totalorder %s78, %s80
    %p87 = scmp.eq.s32.totalorder %s14, 1
    %p88 = por %p86, %p87
    %p89 = scmp.ne.s32.totalorder %s80, %s81
    %p90 = scmp.eq.s32.totalorder %s14, 0
    %p91 = por %p89, %p90
    %p92 = scmp.ne.s32.totalorder %s80, %s81
    %p93 = scmp.eq.s32.totalorder %s15, 1
    %p94 = por %p92, %p93
    %p96 = scmp.ne.s32.totalorder %s81, %s95
    %p97 = scmp.eq.s32.totalorder %s15, 0
    %p98 = por %p96, %p97
    %s99 = ssub.s32 %s16, %s28
    %s100 = ssub.s32 %s17, %s24
    %s101 = sor.u32 %s99, %s100
    %p102 = scmp.eq.s32.totalorder %s101, 0
    %s104 = sadd.s32 %s103, 1
    %s105 = scalar_select %p102, %s103, %s104
    %p108 = pneg %p102
    %p109 = scmp.eq.s32.totalorder %s9, 1
    %p110 = por %p108, %p109
    %p111 = scmp.ne.s32.totalorder %s103, %s106
    %p112 = scmp.eq.s32.totalorder %s9, 0
    %p113 = por %p111, %p112
    %p114 = scmp.ne.s32.totalorder %s103, %s106
    %p115 = scmp.eq.s32.totalorder %s14, 1
    %p116 = por %p114, %p115
    %p117 = scmp.ne.s32.totalorder %s106, %s107
    %p118 = scmp.eq.s32.totalorder %s14, 0
    %p119 = por %p117, %p118
    %p120 = scmp.ne.s32.totalorder %s106, %s107
    %p121 = scmp.eq.s32.totalorder %s15, 1
    %p122 = por %p120, %p121
    %p124 = scmp.ne.s32.totalorder %s107, %s123
    %p125 = scmp.eq.s32.totalorder %s15, 0
    %p126 = por %p124, %p125
    %p127 = scmp.le.s32.totalorder 1, %s9
    %p128 = scmp.lt.s32.totalorder %s9, 3
    %p129 = pnand %p127, %p128
    %p130 = pneg %p129
    // Predicated region
    $region9: #{product_layer.1} parent=5 // pred_check
      _
    $region10: #{product_layer.1} parent=5 // pred_check_branch
      %132 = sbr.rel (%p129) target = $region12
    $region11: #{product_layer.1} parent=5 // pred_region
      %s133 = ssub.s32 %s9, 1
      // Predicated region
      $region13: #{product_layer.1} parent=11 // pred_check
        %p134 = pneg %p70
      $region14: #{product_layer.1} parent=11 // pred_check_branch
        %136 = sbr.rel (%p134) target = $region16
      $region15: #{product_layer.1} parent=11 // pred_region
        _
      $region16: #{product_layer.1} parent=11 // pred_fallthru
        _
      // Predicated region
      $region17: #{product_layer.1} parent=11 // pred_check
        %p137 = pneg %p91
      $region18: #{product_layer.1} parent=11 // pred_check_branch
        %139 = sbr.rel (%p137) target = $region20
      $region19: #{product_layer.1} parent=11 // pred_region
        _
      $region20: #{product_layer.1} parent=11 // pred_fallthru
        _
    $region12: #{product_layer.1} parent=5 // pred_fallthru
      _
    %p140 = scmp.lt.s32.totalorder %s9, 2
    // Predicated region
    $region21: #{product_layer.1} parent=5 // pred_check
      %p141 = pneg %p140
    $region22: #{product_layer.1} parent=5 // pred_check_branch
      %143 = sbr.rel (%p141) target = $region24
    $region23: #{product_layer.1} parent=5 // pred_region
      // Predicated region
      $region25: #{product_layer.1} parent=23 // pred_check
        %p144 = pneg %p43
      $region26: #{product_layer.1} parent=23 // pred_check_branch
        %146 = sbr.rel (%p144) target = $region28
      $region27: #{product_layer.1} parent=23 // pred_region
        %s147 = smul.u32 2, %s17
        %p148 = scmp.lt.s32.totalorder %s16, 1
        %s149 = scalar_select %p148, %s16, 1
        %p150 = scmp.lt.s32.totalorder %s147, 1
        %s151 = scalar_select %p150, %s147, 1
        %s152 = smul.addr %s149, 2
        %s153 = sadd.s32 %s151, %s152
        %s154 = smul.addr %s153, 4
        %s155 = scalar_lea.vmem %s0, %s154
        %s156 = smul.u32 2, %s17
      $region28: #{product_layer.1} parent=23 // pred_fallthru
        _
    $region24: #{product_layer.1} parent=5 // pred_fallthru
      _
    %p157 = scmp.le.s32.totalorder 1, %s9
    %p158 = scmp.lt.s32.totalorder %s9, 3
    %p159 = pnand %p157, %p158
    %p160 = pneg %p159
    // Predicated region
    $region29: #{product_layer.1} parent=5 // pred_check
      _
    $region30: #{product_layer.1} parent=5 // pred_check_branch
      %162 = sbr.rel (%p159) target = $region32
    $region31: #{product_layer.1} parent=5 // pred_region
      %s163 = ssub.s32 %s9, 1
      %s164 = smul.u32 2, %s19
      %p165 = scmp.lt.s32.totalorder %s18, 1
      %s166 = scalar_select %p165, %s18, 1
      %p167 = scmp.lt.s32.totalorder %s164, 1
      %s168 = scalar_select %p167, %s164, 1
      %s169 = smul.addr %s166, 2
      %s170 = sadd.s32 %s168, %s169
      %s171 = smul.addr %s170, 4
      %s172 = scalar_lea.vmem %s0, %s171
      %p173 = pneg %p49
      %p174 = pneg %p46
      %p175 = pneg %p70
      %p176 = pneg %p67
      %p177 = pneg %p91
      %p178 = pneg %p88
      %p179 = pneg %p119
      %p180 = pneg %p116
      %s181 = smul.u32 2, %s19
      %p182 = scmp.lt.s32.totalorder %s18, 1
      %s183 = scalar_select %p182, %s18, 1
      %p184 = scmp.lt.s32.totalorder %s181, 1
      %s185 = scalar_select %p184, %s181, 1
      %s186 = smul.addr %s183, 2
      %s187 = sadd.s32 %s185, %s186
      %s188 = smul.addr %s187, 8
      %s189 = scalar_lea.vmem %s3, %s188
      %s190 = smul.u32 2, %s19
      %p191 = scmp.lt.s32.totalorder %s18, 1
      %s192 = scalar_select %p191, %s18, 1
      %p193 = scmp.lt.s32.totalorder %s190, 1
      %s194 = scalar_select %p193, %s190, 1
      %s195 = smul.addr %s192, 2
      %s196 = sadd.s32 %s194, %s195
      %s197 = smul.addr %s196, 4
      %s198 = scalar_lea.vmem %s0, %s197
      %s199 = smul.u32 2, %s19
      %s200 = smul.u32 2, %s19
      %p201 = scmp.lt.s32.totalorder %s18, 1
      %s202 = scalar_select %p201, %s18, 1
      %p203 = scmp.lt.s32.totalorder %s200, 1
      %s204 = scalar_select %p203, %s200, 1
      %s205 = smul.addr %s202, 2
      %s206 = sadd.s32 %s204, %s205
      %s207 = smul.addr %s206, 8
      %s208 = scalar_lea.vmem %s3, %s207
      %s209 = smul.u32 2, %s19
      %v210 = vld [vmem:[%s198] sm:$0xff]
      %v212 = vrot.slane %v210, 5
      %v213 = vrot.slane %v212, 4
      %v215 = vmul.f32 %v210, %v213
      %v216 = vcombine.high %v210, %v210
      %v219 = vlaneseq
      %v220 = vshrl.u32 %v219, 7
      %v221 = vsub.s32 0, %v220
      %v222 = vrot.slane %v215, %v221
      %v223 = vlaneseq
      %v224 = vshrl.u32 %v223, 7
      %v225 = vsub.s32 4, %v224
      %v226 = vrot.slane %v215, %v225
      %v229 = vlaneseq
      %v230 = vshrl.u32 %v229, 7
      %v231 = vsub.s32 2, %v230
      %v232 = vrot.slane %v215, %v231
      %v233 = vlaneseq
      %v234 = vshrl.u32 %v233, 7
      %v235 = vsub.s32 6, %v234
      %v236 = vrot.slane %v215, %v235
      %vm239 = vcmask 1043456
      %v240 = vsel %vm239, %v210, %v222
      %v241 = vsel %vm239, %v216, %v226
      %vm242 = vcmask 1044480
      %v243 = vsel %vm242, %v240, %v232
      %v244 = vsel %vm242, %v241, %v236
      %v245 = vld [vmem:[%s1] sm:$0xff]
      %v246 = vld [vmem:[%s2] sm:$0xff]
      %248 = vset.pattern.permute.xlu0 0
      %249 = vperm.xlu0 %248, %v246
      %v250 = vpop.permute.xlu0 %249
      %vm252 = vcmask 48128
      %v254 = vsel %vm252, %v245, 0
      %vm256 = vcmask 1045504
      %v258 = vsel %vm256, %v243, 0
      %v261 = vsel %vm256, %v244, 0
      %263 = vmatprep.subr.mxu0 %v261
      %264 = vmatpush1.msra.mxu0 %v258
      %265 = vmatprep.subr.mxu0 0.0
      %266 = vmatpush1.msra.mxu0 0.0
      %267 = vmatprep.subr.mxu0 0.0
      %268 = vmatpush1.msra.mxu0 0.0
      %269 = vmatprep.subr.mxu0 0.0
      %270 = vmatpush1.msra.mxu0 0.0
      %271 = vmatprep.subr.mxu0 0.0
      %272 = vmatpush1.msra.mxu0 0.0
      %273 = vmatprep.subr.mxu0 0.0
      %274 = vmatpush1.msra.mxu0 0.0
      %275 = vmatprep.subr.mxu0 0.0
      %276 = vmatpush1.msra.mxu0 0.0
      %277 = vmatprep.subr.mxu0 0.0
      %278 = vmatpush1.msra.mxu0 0.0
      %279 = vmatprep.subr.mxu0 0.0
      %280 = vmatpush1.msra.mxu0 0.0
      %281 = vmatprep.subr.mxu0 0.0
      %282 = vmatpush1.msra.mxu0 0.0
      %283 = vmatprep.subr.mxu0 0.0
      %284 = vmatpush1.msra.mxu0 0.0
      %285 = vmatprep.subr.mxu0 0.0
      %286 = vmatpush1.msra.mxu0 0.0
      %287 = vmatprep.subr.mxu0 0.0
      %288 = vmatpush1.msra.mxu0 0.0
      %289 = vmatprep.subr.mxu0 0.0
      %290 = vmatpush1.msra.mxu0 0.0
      %291 = vmatprep.subr.mxu0 0.0
      %292 = vmatpush1.msra.mxu0 0.0
      %293 = vmatprep.subr.mxu0 0.0
      %294 = vmatpush1.msra.mxu0 0.0
      %295 = vmatprep.subr.mxu0 0.0
      %296 = vmatpush1.msra.mxu0 0.0
      %297 = vmatprep.subr.mxu0 0.0
      %298 = vmatpush1.msra.mxu0 0.0
      %299 = vmatprep.subr.mxu0 0.0
      %300 = vmatpush1.msra.mxu0 0.0
      %301 = vmatprep.subr.mxu0 0.0
      %302 = vmatpush1.msra.mxu0 0.0
      %303 = vmatprep.subr.mxu0 0.0
      %304 = vmatpush1.msra.mxu0 0.0
      %305 = vmatprep.subr.mxu0 0.0
      %306 = vmatpush1.msra.mxu0 0.0
      %307 = vmatprep.subr.mxu0 0.0
      %308 = vmatpush1.msra.mxu0 0.0
      %309 = vmatprep.subr.mxu0 0.0
      %310 = vmatpush1.msra.mxu0 0.0
      %311 = vmatprep.subr.mxu0 0.0
      %312 = vmatpush1.msra.mxu0 0.0
      %313 = vmatprep.subr.mxu0 0.0
      %314 = vmatpush1.msra.mxu0 0.0
      %315 = vmatprep.subr.mxu0 0.0
      %316 = vmatpush1.msra.mxu0 0.0
      %317 = vmatprep.subr.mxu0 0.0
      %318 = vmatpush1.msra.mxu0 0.0
      %319 = vmatprep.subr.mxu0 0.0
      %320 = vmatpush1.msra.mxu0 0.0
      %321 = vmatprep.subr.mxu0 0.0
      %322 = vmatpush1.msra.mxu0 0.0
      %323 = vmatprep.subr.mxu0 0.0
      %324 = vmatpush1.msra.mxu0 0.0
      %325 = vmatprep.subr.mxu0 0.0
      %326 = vmatpush1.msra.mxu0 0.0
      %327 = vmatprep.mubr.f32.mxu0 0.0
      %328 = vmatmul.mubr.f32.gmra.mrb[0].mxu0 %v254
      %v329 = vpop.f32.mrb[0].mxu0
      %v330 = vadd.f32 %v250, %v329
      %v331 = vpop.f32.mrb[0].mxu0
      %v332 = vadd.f32 %v250, %v331
      %333 = vdwg.mxu0
      %334 = vst [vmem:[%s208] sm:$0xff] %v330
      %335 = vst [vmem:[%s208 + $0x8] sm:$0xff] %v332
      %s336 = smul.u32 2, %s19
      %p337 = scmp.lt.s32.totalorder %s18, 1
      %s338 = scalar_select %p337, %s18, 1
      %p339 = scmp.lt.s32.totalorder %s336, 1
      %s340 = scalar_select %p339, %s336, 1
      %s341 = smul.addr %s338, 2
      %s342 = sadd.s32 %s340, %s341
      %s343 = smul.addr %s342, 8
      %s344 = scalar_lea.vmem %s3, %s343
      // Predicated region
      $region33: #{product_layer.1} parent=31 // pred_check
        %p345 = pneg %p116
      $region34: #{product_layer.1} parent=31 // pred_check_branch
        %347 = sbr.rel (%p345) target = $region36
      $region35: #{product_layer.1} parent=31 // pred_region
        %s348 = smul.u32 2, %s19
      $region36: #{product_layer.1} parent=31 // pred_fallthru
        _
    $region32: #{product_layer.1} parent=5 // pred_fallthru
      _
    %p349 = scmp.le.s32.totalorder 2, %s9
    // Predicated region
    $region37: #{product_layer.1} parent=5 // pred_check
      %p350 = pneg %p349
    $region38: #{product_layer.1} parent=5 // pred_check_branch
      %352 = sbr.rel (%p350) target = $region40
    $region39: #{product_layer.1} parent=5 // pred_region
      %s353 = ssub.s32 %s9, 2
      // Predicated region
      $region41: #{product_layer.1} parent=39 // pred_check
        %p354 = pneg %p122
      $region42: #{product_layer.1} parent=39 // pred_check_branch
        %356 = sbr.rel (%p354) target = $region44
      $region43: #{product_layer.1} parent=39 // pred_region
        %s357 = smul.u32 2, %s21
        %p358 = scmp.lt.s32.totalorder %s20, 1
        %s359 = scalar_select %p358, %s20, 1
        %p360 = scmp.lt.s32.totalorder %s357, 1
        %s361 = scalar_select %p360, %s357, 1
        %s362 = smul.addr %s359, 2
        %s363 = sadd.s32 %s361, %s362
        %s364 = smul.addr %s363, 8
        %s365 = scalar_lea.vmem %s3, %s364
      $region44: #{product_layer.1} parent=39 // pred_fallthru
        _
    $region40: #{product_layer.1} parent=5 // pred_fallthru
      _
  $region6: #{product_layer.1} parent=0 // loop_footer
    %s13 = sadd.s32 1, %s9
  $region7: #{product_layer.1} parent=0 // loop_footer_branch
    %8 = sbr.rel target = $region3
  $region8: #{product_layer.1} parent=0 // loop_exit
    _

</llo_original>
